<compile_context>
chip_gen: v7x
topology: tpu7x:2x2x1
jax: 0.10.0
libtpu: 0.0.40
codegen_flags: <defaults>
</compile_context>

<pallas_src>
import numpy as np
import jax
import jax.numpy as jnp
from jax.experimental import pallas as pl
from jax.experimental.pallas import tpu as pltpu


def _interp_matrix(out_size: int, in_size: int) -> jnp.ndarray:
    """(out_size, in_size) bilinear interpolation matrix, align_corners=False."""
    scale = in_size / out_size
    i = jnp.arange(out_size, dtype=jnp.float32)
    src = (i + 0.5) * scale - 0.5
    src = jnp.clip(src, 0.0, float(in_size - 1))
    i0f = jnp.floor(src)
    frac = src - i0f
    i0 = i0f.astype(jnp.int32)
    i1 = jnp.minimum(i0 + 1, in_size - 1)
    w0 = (1.0 - frac)[:, None] * jax.nn.one_hot(i0, in_size, dtype=jnp.float32)
    w1 = frac[:, None] * jax.nn.one_hot(i1, in_size, dtype=jnp.float32)
    return w0 + w1


def _resize_kernel(x_ref, wh_ref, wwT_ref, o_ref):
    # x_ref  : (TB, H_in, W_in)   block of TB images, native dtype
    # wh_ref : (H_out, H_in)      row (H) interpolation matrix
    # wwT_ref: (W_in, W_out)      column (W) interpolation matrix, transposed
    # o_ref  : (TB, H_out, W_out)
    TB, H_in, W_in = x_ref.shape
    H_out = wh_ref.shape[0]
    W_out = wwT_ref.shape[1]

    x = x_ref[...]  # no explicit f32 upcast: MXU takes native dtype, f32 accum

    # H pass: batched MXU matmul over the whole image block.
    wh_b = jnp.broadcast_to(wh_ref[...], (TB, H_out, H_in))
    t = jnp.einsum("boh,bhw->bow", wh_b, x,
                   preferred_element_type=jnp.float32)       # (TB, H_out, W_in) f32

    # W pass: fold the batch into the MXU M dimension (single big matmul).
    t2 = t.reshape(TB * H_out, W_in).astype(wwT_ref.dtype)
    out = jnp.dot(t2, wwT_ref[...],
                  preferred_element_type=jnp.float32)        # (TB*H_out, W_out)

    o_ref[...] = out.reshape(TB, H_out, W_out).astype(o_ref.dtype)


def _pick_batch_tile(B, H_in, W_in, H_out, W_out, dtype,
                     budget_bytes=8 * 1024 * 1024):
    """Largest divisor of B whose per-block VMEM footprint fits the budget.

    Counts double-buffered input/output tiles with (8,128) padding, the
    broadcast row weights and the f32 intermediate, so the choice is safe
    across v5e/v6e (128 MiB VMEM) and v7x (64 MiB physical, 32 MiB scoped).
    """
    def pad(n, m):
        return -(-n // m) * m

    esz = np.dtype(dtype).itemsize

    def block_bytes(tb):
        x_tile = 2 * tb * pad(H_in, 8) * pad(W_in, 128) * esz          # 2x buffered in
        o_tile = 2 * tb * pad(H_out, 8) * pad(W_out, 128) * esz        # 2x buffered out
        wh_b = tb * pad(H_out, 8) * pad(H_in, 128) * 4                 # broadcast weights
        interm = pad(tb * H_out, 8) * pad(W_in, 128) * 4               # f32 H-pass result
        return x_tile + o_tile + wh_b + interm

    best = 1
    for tb in range(1, B + 1):
        if B % tb == 0 and block_bytes(tb) <= budget_bytes:
            best = tb
    return best


def downsample_bilinear(x, size):
    """Equivalent of torch.nn.functional.interpolate(x, size=size, mode='bilinear')."""
    N, C, H_in, W_in = x.shape
    H_out, W_out = size
    B = N * C
    xb = x.reshape(B, H_in, W_in)

    # bf16 weights for bf16 inputs (native MXU operands), f32 otherwise.
    wdtype = jnp.bfloat16 if x.dtype == jnp.bfloat16 else jnp.float32
    wh = _interp_matrix(H_out, H_in).astype(wdtype)        # (H_out, H_in)
    wwT = _interp_matrix(W_out, W_in).T.astype(wdtype)     # (W_in, W_out)

    TB = _pick_batch_tile(B, H_in, W_in, H_out, W_out, x.dtype)
    n_blocks = B // TB

    out = pl.pallas_call(
        _resize_kernel,
        out_shape=jax.ShapeDtypeStruct((B, H_out, W_out), x.dtype),
        grid=(n_blocks,),
        in_specs=[
            pl.BlockSpec((TB, H_in, W_in), lambda i: (i, 0, 0)),   # contiguous HBM slab
            pl.BlockSpec((H_out, H_in), lambda i: (0, 0)),         # resident weights
            pl.BlockSpec((W_in, W_out), lambda i: (0, 0)),         # resident weights
        ],
        out_specs=pl.BlockSpec((TB, H_out, W_out), lambda i: (i, 0, 0)),
        compiler_params=pltpu.CompilerParams(
            dimension_semantics=("parallel",)),
    )(xb, wh, wwT)
    return out.reshape(N, C, H_out, W_out)


def _ref_downsample_bilinear(x, size):
    """Pure-JAX reference using direct gather (same align_corners=False math)."""
    N, C, H_in, W_in = x.shape
    H_out, W_out = size

    def coords(out_size, in_size):
        scale = in_size / out_size
        src = (jnp.arange(out_size, dtype=jnp.float32) + 0.5) * scale - 0.5
        src = jnp.clip(src, 0.0, float(in_size - 1))
        i0 = jnp.floor(src).astype(jnp.int32)
        i1 = jnp.minimum(i0 + 1, in_size - 1)
        frac = src - i0.astype(jnp.float32)
        return i0, i1, frac

    h0, h1, hf = coords(H_out, H_in)
    w0, w1, wf = coords(W_out, W_in)
    xf = x.astype(jnp.float32)
    top = xf[:, :, h0, :] * (1.0 - hf)[None, None, :, None] + \
          xf[:, :, h1, :] * hf[None, None, :, None]
    out = top[:, :, :, w0] * (1.0 - wf)[None, None, None, :] + \
          top[:, :, :, w1] * wf[None, None, None, :]
    return out.astype(x.dtype)


if __name__ == "__main__":
    key = jax.random.PRNGKey(0)
    N, C, H, W = 2, 4, 16, 16
    size = (8, 8)  # Downsample target size
    x = jax.random.normal(key, (N, C, H, W), dtype=jnp.float32)

    y = downsample_bilinear(x, size)
    y = jax.block_until_ready(y)

    y_ref = _ref_downsample_bilinear(x, size)
    assert y.shape == (N, C, size[0], size[1])
    assert jnp.allclose(y, y_ref, atol=1e-5, rtol=1e-5), "mismatch vs reference"

    print("KERNEL_OK")
</pallas_src>

<mosaic_0001>
module attributes {stable_mosaic.version = 11 : i64} {
  func.func @_resize_kernel(%arg0: i32, %arg1: memref<8x16x16xf32, #tpu.memory_space<vmem>>, %arg2: memref<8x16xf32, #tpu.memory_space<vmem>>, %arg3: memref<16x8xf32, #tpu.memory_space<vmem>>, %arg4: memref<8x8x8xf32, #tpu.memory_space<vmem>>) attributes {dimension_semantics = [#tpu.dimension_semantics<parallel>], iteration_bounds = array<i64: 1>, scalar_prefetch = 0 : i64, scratch_operands = 0 : i64, tpu.core_type = #tpu.core_type<tc>, window_params = [{transform_indices = @transform_0, window_bounds = array<i64: 8, 16, 16>}, {pipeline_mode = #tpu.pipeline_mode<synchronous>, transform_indices = @transform_1, window_bounds = array<i64: 8, 16>}, {pipeline_mode = #tpu.pipeline_mode<synchronous>, transform_indices = @transform_2, window_bounds = array<i64: 16, 8>}, {transform_indices = @transform_3, window_bounds = array<i64: 8, 8, 8>}]} {
    %c0 = arith.constant 0 : index
    %c0_0 = arith.constant 0 : index
    %c0_1 = arith.constant 0 : index
    %0 = vector.load %arg1[%c0, %c0_0, %c0_1] : memref<8x16x16xf32, #tpu.memory_space<vmem>>, vector<8x16x16xf32>
    %c0_2 = arith.constant 0 : index
    %c0_3 = arith.constant 0 : index
    %1 = vector.load %arg2[%c0_2, %c0_3] : memref<8x16xf32, #tpu.memory_space<vmem>>, vector<8x16xf32>
    %2 = vector.shape_cast %1 : vector<8x16xf32> to vector<1x8x16xf32>
    %3 = vector.broadcast %2 : vector<1x8x16xf32> to vector<8x8x16xf32>
    "tpu.trace_start"() <{level = 10 : i32, message = "boh,bhw->bow"}> : () -> ()
    %cst = arith.constant dense<0.000000e+00> : vector<8x8x16xf32>
    %4 = tpu.matmul %3, %0, %cst {dimension_numbers = #tpu.dot_dimension_numbers<[2], [1], [1], [2], [0, 0, 0, 1, 1, 2], [0], [0]>} : vector<8x8x16xf32>, vector<8x16x16xf32>, vector<8x8x16xf32> -> vector<8x8x16xf32>
    "tpu.trace_stop"() : () -> ()
    %5 = vector.shape_cast %4 : vector<8x8x16xf32> to vector<64x16xf32>
    %c0_4 = arith.constant 0 : index
    %c0_5 = arith.constant 0 : index
    %6 = vector.load %arg3[%c0_4, %c0_5] : memref<16x8xf32, #tpu.memory_space<vmem>>, vector<16x8xf32>
    %cst_6 = arith.constant dense<0.000000e+00> : vector<64x8xf32>
    %7 = tpu.matmul %5, %6, %cst_6 {dimension_numbers = #tpu.dot_dimension_numbers<[1], [0], [0], [1], [0, 0, 1, 1], [], []>} : vector<64x16xf32>, vector<16x8xf32>, vector<64x8xf32> -> vector<64x8xf32>
    %8 = vector.shape_cast %7 : vector<64x8xf32> to vector<8x8x8xf32>
    %c0_7 = arith.constant 0 : index
    %c0_8 = arith.constant 0 : index
    %c0_9 = arith.constant 0 : index
    %9 = vector.load %arg4[%c0_7, %c0_8, %c0_9] : memref<8x8x8xf32, #tpu.memory_space<vmem>>, vector<8x8x8xf32>
    tpu.vector_store %arg4[%c0_7, %c0_8, %c0_9], %8 {strides = array<i32>} : memref<8x8x8xf32, #tpu.memory_space<vmem>>, vector<8x8x8xf32>,
    return
  }
  func.func @transform_0(%arg0: i32) -> (i32, i32, i32) {
    %c0_i32 = arith.constant 0 : i32
    %c0_i32_0 = arith.constant 0 : i32
    %c0_i32_1 = arith.constant 0 : i32
    return %arg0, %c0_i32, %c0_i32_0 : i32, i32, i32
  }
  func.func @transform_1(%arg0: i32) -> (i32, i32) {
    %c0_i32 = arith.constant 0 : i32
    %c0_i32_0 = arith.constant 0 : i32
    %c0_i32_1 = arith.constant 0 : i32
    return %c0_i32, %c0_i32_0 : i32, i32
  }
  func.func @transform_2(%arg0: i32) -> (i32, i32) {
    %c0_i32 = arith.constant 0 : i32
    %c0_i32_0 = arith.constant 0 : i32
    %c0_i32_1 = arith.constant 0 : i32
    return %c0_i32, %c0_i32_0 : i32, i32
  }
  func.func @transform_3(%arg0: i32) -> (i32, i32, i32) {
    %c0_i32 = arith.constant 0 : i32
    %c0_i32_0 = arith.constant 0 : i32
    %c0_i32_1 = arith.constant 0 : i32
    return %arg0, %c0_i32, %c0_i32_0 : i32, i32, i32
  }
}

</mosaic_0001>

<llo_original>
// kernel: tpu_custom_call.1
$region0: #{tpu_custom_call.1}
  #allocation0 [shape = 'u32[]', space=smem, size = 0x4, offset = 0x4, fixed_abs, tag = 'smem constant byte address 0x4 - core index']
  #allocation1 [shape = 'u32[144,128]{1,0:T(1,128)}', space=vmem, size = 0x12000, scoped, tag = 'internal scratch']
  %s0 = inlined_call_operand.hbm [shape: f32[8,16,16], index: 0, kind: input, shape index: {}]
  %s1 = inlined_call_operand.vmem [shape: f32[8,16], index: 1, kind: input, shape index: {}]
  %s2 = inlined_call_operand.vmem [shape: f32[16,8], index: 2, kind: input, shape index: {}]
  %s3 = inlined_call_operand.hbm [shape: f32[8,8,8], index: 3, kind: output, shape index: {}]
  %s4 = sld [smem:[#allocation0]]
  $region26: #{tpu_custom_call.1} parent=0
    _
  %s6 = ssub.s32 1, %s4
  %s7 = scalar_select 0, %s6, %s4
  $region1: #{tpu_custom_call.1} parent=0
    #allocation2 [shape = 'u8[65536]{0}', space=vmem, size = 0x10000, scoped, tag = 'input window, operand 0, single buffered']
    #allocation3 [shape = 's32[1]{0}', space=sflag, size = 0x4, scoped, tag = 'scoped memory for tpu_custom_call.1']
    #allocation4 [shape = 's32[1]{0}', space=sflag, size = 0x4, scoped, tag = 'scoped memory for tpu_custom_call.1']
    #allocation5 [shape = 'u8[32768]{0}', space=vmem, size = 0x8000, scoped, tag = 'output window, operand 0, single buffered']
    %8 = vsyncpa [#allocation3], 0
    %9 = vsyncpa [#allocation4], 0
    // Predicated region
    $region2: #{tpu_custom_call.1} parent=1 // pred_check
      _
    $region3: #{tpu_custom_call.1} parent=1 // pred_check_branch
      %11 = sbr.rel (0) target = $region5
    $region4: #{tpu_custom_call.1} parent=1 // pred_region
      %s13 = ssub.s32 2048, 2048
      %14 = vsyncadd [#allocation3], %s13
      %s15 = sshll.u32 [#allocation2], 4
      %s16 = int_to_ptr.vmem [resolvable:$true] %s15
      %21 = dma.hbm_to_vmem [thread:$0]  %s0, 2048, %s16, [#allocation3], 128, 128, 8
    $region5: #{tpu_custom_call.1} parent=1 // pred_fallthru
      _
    // Predicated region
    $region6: #{tpu_custom_call.1} parent=1 // pred_check
      _
    $region7: #{tpu_custom_call.1} parent=1 // pred_check_branch
      %23 = sbr.rel (0) target = $region9
    $region8: #{tpu_custom_call.1} parent=1 // pred_region
      _
    $region9: #{tpu_custom_call.1} parent=1 // pred_fallthru
      _
    // Predicated region
    $region10: #{tpu_custom_call.1} parent=1 // pred_check
      _
    $region11: #{tpu_custom_call.1} parent=1 // pred_check_branch
      %25 = sbr.rel (0) target = $region13
    $region12: #{tpu_custom_call.1} parent=1 // pred_region
      _
    $region13: #{tpu_custom_call.1} parent=1 // pred_fallthru
      _
    // Predicated region
    $region14: #{tpu_custom_call.1} parent=1 // pred_check
      _
    $region15: #{tpu_custom_call.1} parent=1 // pred_check_branch
      %27 = sbr.rel (0) target = $region17
    $region16: #{tpu_custom_call.1} parent=1 // pred_region
      %28 = dma.done [#allocation3], 2048
    $region17: #{tpu_custom_call.1} parent=1 // pred_fallthru
      _
    %v29 = vld [vmem:[#allocation2] sm:$0xff]
    %v30 = vld [vmem:[#allocation2 + $0x8] sm:$0xff]
    %v31 = vld [vmem:[#allocation2 + $0x10] sm:$0xff]
    %v32 = vld [vmem:[#allocation2 + $0x18] sm:$0xff]
    %v33 = vld [vmem:[#allocation2 + $0x20] sm:$0xff]
    %v34 = vld [vmem:[#allocation2 + $0x28] sm:$0xff]
    %v35 = vld [vmem:[#allocation2 + $0x30] sm:$0xff]
    %v36 = vld [vmem:[#allocation2 + $0x38] sm:$0xff]
    %v37 = vld [vmem:[#allocation2 + $0x40] sm:$0xff]
    %v38 = vld [vmem:[#allocation2 + $0x48] sm:$0xff]
    %v39 = vld [vmem:[#allocation2 + $0x50] sm:$0xff]
    %v40 = vld [vmem:[#allocation2 + $0x58] sm:$0xff]
    %v41 = vld [vmem:[#allocation2 + $0x60] sm:$0xff]
    %v42 = vld [vmem:[#allocation2 + $0x68] sm:$0xff]
    %v43 = vld [vmem:[#allocation2 + $0x70] sm:$0xff]
    %v44 = vld [vmem:[#allocation2 + $0x78] sm:$0xff]
    %v45 = vld [vmem:[%s1] sm:$0xff]
    %vm46 = vcmask 130048
    %v48 = vsel %vm46, %v45, 0
    %50 = vmatprep.subr.mxu0 0.0
    %51 = vmatpush1.msra.mxu0 %v29
    %52 = vmatprep.subr.mxu0 0.0
    %53 = vmatpush1.msra.mxu0 %v30
    %54 = vmatprep.subr.mxu0 0.0
    %55 = vmatpush1.msra.mxu0 0.0
    %56 = vmatprep.subr.mxu0 0.0
    %57 = vmatpush1.msra.mxu0 0.0
    %58 = vmatprep.subr.mxu0 0.0
    %59 = vmatpush1.msra.mxu0 0.0
    %60 = vmatprep.subr.mxu0 0.0
    %61 = vmatpush1.msra.mxu0 0.0
    %62 = vmatprep.subr.mxu0 0.0
    %63 = vmatpush1.msra.mxu0 0.0
    %64 = vmatprep.subr.mxu0 0.0
    %65 = vmatpush1.msra.mxu0 0.0
    %66 = vmatprep.subr.mxu0 0.0
    %67 = vmatpush1.msra.mxu0 0.0
    %68 = vmatprep.subr.mxu0 0.0
    %69 = vmatpush1.msra.mxu0 0.0
    %70 = vmatprep.subr.mxu0 0.0
    %71 = vmatpush1.msra.mxu0 0.0
    %72 = vmatprep.subr.mxu0 0.0
    %73 = vmatpush1.msra.mxu0 0.0
    %74 = vmatprep.subr.mxu0 0.0
    %75 = vmatpush1.msra.mxu0 0.0
    %76 = vmatprep.subr.mxu0 0.0
    %77 = vmatpush1.msra.mxu0 0.0
    %78 = vmatprep.subr.mxu0 0.0
    %79 = vmatpush1.msra.mxu0 0.0
    %80 = vmatprep.subr.mxu0 0.0
    %81 = vmatpush1.msra.mxu0 0.0
    %82 = vmatprep.subr.mxu0 0.0
    %83 = vmatpush1.msra.mxu0 0.0
    %84 = vmatprep.subr.mxu0 0.0
    %85 = vmatpush1.msra.mxu0 0.0
    %86 = vmatprep.subr.mxu0 0.0
    %87 = vmatpush1.msra.mxu0 0.0
    %88 = vmatprep.subr.mxu0 0.0
    %89 = vmatpush1.msra.mxu0 0.0
    %90 = vmatprep.subr.mxu0 0.0
    %91 = vmatpush1.msra.mxu0 0.0
    %92 = vmatprep.subr.mxu0 0.0
    %93 = vmatpush1.msra.mxu0 0.0
    %94 = vmatprep.subr.mxu0 0.0
    %95 = vmatpush1.msra.mxu0 0.0
    %96 = vmatprep.subr.mxu0 0.0
    %97 = vmatpush1.msra.mxu0 0.0
    %98 = vmatprep.subr.mxu0 0.0
    %99 = vmatpush1.msra.mxu0 0.0
    %100 = vmatprep.subr.mxu0 0.0
    %101 = vmatpush1.msra.mxu0 0.0
    %102 = vmatprep.subr.mxu0 0.0
    %103 = vmatpush1.msra.mxu0 0.0
    %104 = vmatprep.subr.mxu0 0.0
    %105 = vmatpush1.msra.mxu0 0.0
    %106 = vmatprep.subr.mxu0 0.0
    %107 = vmatpush1.msra.mxu0 0.0
    %108 = vmatprep.subr.mxu0 0.0
    %109 = vmatpush1.msra.mxu0 0.0
    %110 = vmatprep.subr.mxu0 0.0
    %111 = vmatpush1.msra.mxu0 0.0
    %112 = vmatprep.subr.mxu0 0.0
    %113 = vmatpush1.msra.mxu0 0.0
    %114 = vmatprep.mubr.f32.mxu0 0.0
    %115 = vmatmul.mubr.f32.gmra.mrb[0].mxu0 %v48
    %v116 = vpop.f32.mrb[0].mxu0
    %v117 = vadd.f32 0.0, %v116
    %v118 = vpop.f32.mrb[0].mxu0
    %119 = vdwg.mxu0
    %120 = vmatprep.subr.mxu0 0.0
    %121 = vmatpush1.msra.mxu0 %v31
    %122 = vmatprep.subr.mxu0 0.0
    %123 = vmatpush1.msra.mxu0 %v32
    %124 = vmatprep.subr.mxu0 0.0
    %125 = vmatpush1.msra.mxu0 0.0
    %126 = vmatprep.subr.mxu0 0.0
    %127 = vmatpush1.msra.mxu0 0.0
    %128 = vmatprep.subr.mxu0 0.0
    %129 = vmatpush1.msra.mxu0 0.0
    %130 = vmatprep.subr.mxu0 0.0
    %131 = vmatpush1.msra.mxu0 0.0
    %132 = vmatprep.subr.mxu0 0.0
    %133 = vmatpush1.msra.mxu0 0.0
    %134 = vmatprep.subr.mxu0 0.0
    %135 = vmatpush1.msra.mxu0 0.0
    %136 = vmatprep.subr.mxu0 0.0
    %137 = vmatpush1.msra.mxu0 0.0
    %138 = vmatprep.subr.mxu0 0.0
    %139 = vmatpush1.msra.mxu0 0.0
    %140 = vmatprep.subr.mxu0 0.0
    %141 = vmatpush1.msra.mxu0 0.0
    %142 = vmatprep.subr.mxu0 0.0
    %143 = vmatpush1.msra.mxu0 0.0
    %144 = vmatprep.subr.mxu0 0.0
    %145 = vmatpush1.msra.mxu0 0.0
    %146 = vmatprep.subr.mxu0 0.0
    %147 = vmatpush1.msra.mxu0 0.0
    %148 = vmatprep.subr.mxu0 0.0
    %149 = vmatpush1.msra.mxu0 0.0
    %150 = vmatprep.subr.mxu0 0.0
    %151 = vmatpush1.msra.mxu0 0.0
    %152 = vmatprep.subr.mxu0 0.0
    %153 = vmatpush1.msra.mxu0 0.0
    %154 = vmatprep.subr.mxu0 0.0
    %155 = vmatpush1.msra.mxu0 0.0
    %156 = vmatprep.subr.mxu0 0.0
    %157 = vmatpush1.msra.mxu0 0.0
    %158 = vmatprep.subr.mxu0 0.0
    %159 = vmatpush1.msra.mxu0 0.0
    %160 = vmatprep.subr.mxu0 0.0
    %161 = vmatpush1.msra.mxu0 0.0
    %162 = vmatprep.subr.mxu0 0.0
    %163 = vmatpush1.msra.mxu0 0.0
    %164 = vmatprep.subr.mxu0 0.0
    %165 = vmatpush1.msra.mxu0 0.0
    %166 = vmatprep.subr.mxu0 0.0
    %167 = vmatpush1.msra.mxu0 0.0
    %168 = vmatprep.subr.mxu0 0.0
    %169 = vmatpush1.msra.mxu0 0.0
    %170 = vmatprep.subr.mxu0 0.0
    %171 = vmatpush1.msra.mxu0 0.0
    %172 = vmatprep.subr.mxu0 0.0
    %173 = vmatpush1.msra.mxu0 0.0
    %174 = vmatprep.subr.mxu0 0.0
    %175 = vmatpush1.msra.mxu0 0.0
    %176 = vmatprep.subr.mxu0 0.0
    %177 = vmatpush1.msra.mxu0 0.0
    %178 = vmatprep.subr.mxu0 0.0
    %179 = vmatpush1.msra.mxu0 0.0
    %180 = vmatprep.subr.mxu0 0.0
    %181 = vmatpush1.msra.mxu0 0.0
    %182 = vmatprep.subr.mxu0 0.0
    %183 = vmatpush1.msra.mxu0 0.0
    %184 = vmatprep.mubr.f32.mxu0 0.0
    %185 = vmatmul.mubr.f32.gmra.mrb[0].mxu0 %v48
    %v186 = vpop.f32.mrb[0].mxu0
    %v187 = vadd.f32 0.0, %v186
    %v188 = vpop.f32.mrb[0].mxu0
    %189 = vdwg.mxu0
    %190 = vmatprep.subr.mxu0 0.0
    %191 = vmatpush1.msra.mxu0 %v33
    %192 = vmatprep.subr.mxu0 0.0
    %193 = vmatpush1.msra.mxu0 %v34
    %194 = vmatprep.subr.mxu0 0.0
    %195 = vmatpush1.msra.mxu0 0.0
    %196 = vmatprep.subr.mxu0 0.0
    %197 = vmatpush1.msra.mxu0 0.0
    %198 = vmatprep.subr.mxu0 0.0
    %199 = vmatpush1.msra.mxu0 0.0
    %200 = vmatprep.subr.mxu0 0.0
    %201 = vmatpush1.msra.mxu0 0.0
    %202 = vmatprep.subr.mxu0 0.0
    %203 = vmatpush1.msra.mxu0 0.0
    %204 = vmatprep.subr.mxu0 0.0
    %205 = vmatpush1.msra.mxu0 0.0
    %206 = vmatprep.subr.mxu0 0.0
    %207 = vmatpush1.msra.mxu0 0.0
    %208 = vmatprep.subr.mxu0 0.0
    %209 = vmatpush1.msra.mxu0 0.0
    %210 = vmatprep.subr.mxu0 0.0
    %211 = vmatpush1.msra.mxu0 0.0
    %212 = vmatprep.subr.mxu0 0.0
    %213 = vmatpush1.msra.mxu0 0.0
    %214 = vmatprep.subr.mxu0 0.0
    %215 = vmatpush1.msra.mxu0 0.0
    %216 = vmatprep.subr.mxu0 0.0
    %217 = vmatpush1.msra.mxu0 0.0
    %218 = vmatprep.subr.mxu0 0.0
    %219 = vmatpush1.msra.mxu0 0.0
    %220 = vmatprep.subr.mxu0 0.0
    %221 = vmatpush1.msra.mxu0 0.0
    %222 = vmatprep.subr.mxu0 0.0
    %223 = vmatpush1.msra.mxu0 0.0
    %224 = vmatprep.subr.mxu0 0.0
    %225 = vmatpush1.msra.mxu0 0.0
    %226 = vmatprep.subr.mxu0 0.0
    %227 = vmatpush1.msra.mxu0 0.0
    %228 = vmatprep.subr.mxu0 0.0
    %229 = vmatpush1.msra.mxu0 0.0
    %230 = vmatprep.subr.mxu0 0.0
    %231 = vmatpush1.msra.mxu0 0.0
    %232 = vmatprep.subr.mxu0 0.0
    %233 = vmatpush1.msra.mxu0 0.0
    %234 = vmatprep.subr.mxu0 0.0
    %235 = vmatpush1.msra.mxu0 0.0
    %236 = vmatprep.subr.mxu0 0.0
    %237 = vmatpush1.msra.mxu0 0.0
    %238 = vmatprep.subr.mxu0 0.0
    %239 = vmatpush1.msra.mxu0 0.0
    %240 = vmatprep.subr.mxu0 0.0
    %241 = vmatpush1.msra.mxu0 0.0
    %242 = vmatprep.subr.mxu0 0.0
    %243 = vmatpush1.msra.mxu0 0.0
    %244 = vmatprep.subr.mxu0 0.0
    %245 = vmatpush1.msra.mxu0 0.0
    %246 = vmatprep.subr.mxu0 0.0
    %247 = vmatpush1.msra.mxu0 0.0
    %248 = vmatprep.subr.mxu0 0.0
    %249 = vmatpush1.msra.mxu0 0.0
    %250 = vmatprep.subr.mxu0 0.0
    %251 = vmatpush1.msra.mxu0 0.0
    %252 = vmatprep.subr.mxu0 0.0
    %253 = vmatpush1.msra.mxu0 0.0
    %254 = vmatprep.mubr.f32.mxu0 0.0
    %255 = vmatmul.mubr.f32.gmra.mrb[0].mxu0 %v48
    %v256 = vpop.f32.mrb[0].mxu0
    %v257 = vadd.f32 0.0, %v256
    %v258 = vpop.f32.mrb[0].mxu0
    %259 = vdwg.mxu0
    %260 = vmatprep.subr.mxu0 0.0
    %261 = vmatpush1.msra.mxu0 %v35
    %262 = vmatprep.subr.mxu0 0.0
    %263 = vmatpush1.msra.mxu0 %v36
    %264 = vmatprep.subr.mxu0 0.0
    %265 = vmatpush1.msra.mxu0 0.0
    %266 = vmatprep.subr.mxu0 0.0
    %267 = vmatpush1.msra.mxu0 0.0
    %268 = vmatprep.subr.mxu0 0.0
    %269 = vmatpush1.msra.mxu0 0.0
    %270 = vmatprep.subr.mxu0 0.0
    %271 = vmatpush1.msra.mxu0 0.0
    %272 = vmatprep.subr.mxu0 0.0
    %273 = vmatpush1.msra.mxu0 0.0
    %274 = vmatprep.subr.mxu0 0.0
    %275 = vmatpush1.msra.mxu0 0.0
    %276 = vmatprep.subr.mxu0 0.0
    %277 = vmatpush1.msra.mxu0 0.0
    %278 = vmatprep.subr.mxu0 0.0
    %279 = vmatpush1.msra.mxu0 0.0
    %280 = vmatprep.subr.mxu0 0.0
    %281 = vmatpush1.msra.mxu0 0.0
    %282 = vmatprep.subr.mxu0 0.0
    %283 = vmatpush1.msra.mxu0 0.0
    %284 = vmatprep.subr.mxu0 0.0
    %285 = vmatpush1.msra.mxu0 0.0
    %286 = vmatprep.subr.mxu0 0.0
    %287 = vmatpush1.msra.mxu0 0.0
    %288 = vmatprep.subr.mxu0 0.0
    %289 = vmatpush1.msra.mxu0 0.0
    %290 = vmatprep.subr.mxu0 0.0
    %291 = vmatpush1.msra.mxu0 0.0
    %292 = vmatprep.subr.mxu0 0.0
    %293 = vmatpush1.msra.mxu0 0.0
    %294 = vmatprep.subr.mxu0 0.0
    %295 = vmatpush1.msra.mxu0 0.0
    %296 = vmatprep.subr.mxu0 0.0
    %297 = vmatpush1.msra.mxu0 0.0
    %298 = vmatprep.subr.mxu0 0.0
    %299 = vmatpush1.msra.mxu0 0.0
    %300 = vmatprep.subr.mxu0 0.0
    %301 = vmatpush1.msra.mxu0 0.0
    %302 = vmatprep.subr.mxu0 0.0
    %303 = vmatpush1.msra.mxu0 0.0
    %304 = vmatprep.subr.mxu0 0.0
    %305 = vmatpush1.msra.mxu0 0.0
    %306 = vmatprep.subr.mxu0 0.0
    %307 = vmatpush1.msra.mxu0 0.0
    %308 = vmatprep.subr.mxu0 0.0
    %309 = vmatpush1.msra.mxu0 0.0
    %310 = vmatprep.subr.mxu0 0.0
    %311 = vmatpush1.msra.mxu0 0.0
    %312 = vmatprep.subr.mxu0 0.0
    %313 = vmatpush1.msra.mxu0 0.0
    %314 = vmatprep.subr.mxu0 0.0
    %315 = vmatpush1.msra.mxu0 0.0
    %316 = vmatprep.subr.mxu0 0.0
    %317 = vmatpush1.msra.mxu0 0.0
    %318 = vmatprep.subr.mxu0 0.0
    %319 = vmatpush1.msra.mxu0 0.0
    %320 = vmatprep.subr.mxu0 0.0
    %321 = vmatpush1.msra.mxu0 0.0
    %322 = vmatprep.subr.mxu0 0.0
    %323 = vmatpush1.msra.mxu0 0.0
    %324 = vmatprep.mubr.f32.mxu0 0.0
    %325 = vmatmul.mubr.f32.gmra.mrb[0].mxu0 %v48
    %v326 = vpop.f32.mrb[0].mxu0
    %v327 = vadd.f32 0.0, %v326
    %v328 = vpop.f32.mrb[0].mxu0
    %329 = vdwg.mxu0
    %330 = vmatprep.subr.mxu0 0.0
    %331 = vmatpush1.msra.mxu0 %v37
    %332 = vmatprep.subr.mxu0 0.0
    %333 = vmatpush1.msra.mxu0 %v38
    %334 = vmatprep.subr.mxu0 0.0
    %335 = vmatpush1.msra.mxu0 0.0
    %336 = vmatprep.subr.mxu0 0.0
    %337 = vmatpush1.msra.mxu0 0.0
    %338 = vmatprep.subr.mxu0 0.0
    %339 = vmatpush1.msra.mxu0 0.0
    %340 = vmatprep.subr.mxu0 0.0
    %341 = vmatpush1.msra.mxu0 0.0
    %342 = vmatprep.subr.mxu0 0.0
    %343 = vmatpush1.msra.mxu0 0.0
    %344 = vmatprep.subr.mxu0 0.0
    %345 = vmatpush1.msra.mxu0 0.0
    %346 = vmatprep.subr.mxu0 0.0
    %347 = vmatpush1.msra.mxu0 0.0
    %348 = vmatprep.subr.mxu0 0.0
    %349 = vmatpush1.msra.mxu0 0.0
    %350 = vmatprep.subr.mxu0 0.0
    %351 = vmatpush1.msra.mxu0 0.0
    %352 = vmatprep.subr.mxu0 0.0
    %353 = vmatpush1.msra.mxu0 0.0
    %354 = vmatprep.subr.mxu0 0.0
    %355 = vmatpush1.msra.mxu0 0.0
    %356 = vmatprep.subr.mxu0 0.0
    %357 = vmatpush1.msra.mxu0 0.0
    %358 = vmatprep.subr.mxu0 0.0
    %359 = vmatpush1.msra.mxu0 0.0
    %360 = vmatprep.subr.mxu0 0.0
    %361 = vmatpush1.msra.mxu0 0.0
    %362 = vmatprep.subr.mxu0 0.0
    %363 = vmatpush1.msra.mxu0 0.0
    %364 = vmatprep.subr.mxu0 0.0
    %365 = vmatpush1.msra.mxu0 0.0
    %366 = vmatprep.subr.mxu0 0.0
    %367 = vmatpush1.msra.mxu0 0.0
    %368 = vmatprep.subr.mxu0 0.0
    %369 = vmatpush1.msra.mxu0 0.0
    %370 = vmatprep.subr.mxu0 0.0
    %371 = vmatpush1.msra.mxu0 0.0
    %372 = vmatprep.subr.mxu0 0.0
    %373 = vmatpush1.msra.mxu0 0.0
    %374 = vmatprep.subr.mxu0 0.0
    %375 = vmatpush1.msra.mxu0 0.0
    %376 = vmatprep.subr.mxu0 0.0
    %377 = vmatpush1.msra.mxu0 0.0
    %378 = vmatprep.subr.mxu0 0.0
    %379 = vmatpush1.msra.mxu0 0.0
    %380 = vmatprep.subr.mxu0 0.0
    %381 = vmatpush1.msra.mxu0 0.0
    %382 = vmatprep.subr.mxu0 0.0
    %383 = vmatpush1.msra.mxu0 0.0
    %384 = vmatprep.subr.mxu0 0.0
    %385 = vmatpush1.msra.mxu0 0.0
    %386 = vmatprep.subr.mxu0 0.0
    %387 = vmatpush1.msra.mxu0 0.0
    %388 = vmatprep.subr.mxu0 0.0
    %389 = vmatpush1.msra.mxu0 0.0
    %390 = vmatprep.subr.mxu0 0.0
    %391 = vmatpush1.msra.mxu0 0.0
    %392 = vmatprep.subr.mxu0 0.0
    %393 = vmatpush1.msra.mxu0 0.0
    %394 = vmatprep.mubr.f32.mxu0 0.0
    %395 = vmatmul.mubr.f32.gmra.mrb[0].mxu0 %v48
    %v396 = vpop.f32.mrb[0].mxu0
    %v397 = vadd.f32 0.0, %v396
    %v398 = vpop.f32.mrb[0].mxu0
    %399 = vdwg.mxu0
    %400 = vmatprep.subr.mxu0 0.0
    %401 = vmatpush1.msra.mxu0 %v39
    %402 = vmatprep.subr.mxu0 0.0
    %403 = vmatpush1.msra.mxu0 %v40
    %404 = vmatprep.subr.mxu0 0.0
    %405 = vmatpush1.msra.mxu0 0.0
    %406 = vmatprep.subr.mxu0 0.0
    %407 = vmatpush1.msra.mxu0 0.0
    %408 = vmatprep.subr.mxu0 0.0
    %409 = vmatpush1.msra.mxu0 0.0
    %410 = vmatprep.subr.mxu0 0.0
    %411 = vmatpush1.msra.mxu0 0.0
    %412 = vmatprep.subr.mxu0 0.0
    %413 = vmatpush1.msra.mxu0 0.0
    %414 = vmatprep.subr.mxu0 0.0
    %415 = vmatpush1.msra.mxu0 0.0
    %416 = vmatprep.subr.mxu0 0.0
    %417 = vmatpush1.msra.mxu0 0.0
    %418 = vmatprep.subr.mxu0 0.0
    %419 = vmatpush1.msra.mxu0 0.0
    %420 = vmatprep.subr.mxu0 0.0
    %421 = vmatpush1.msra.mxu0 0.0
    %422 = vmatprep.subr.mxu0 0.0
    %423 = vmatpush1.msra.mxu0 0.0
    %424 = vmatprep.subr.mxu0 0.0
    %425 = vmatpush1.msra.mxu0 0.0
    %426 = vmatprep.subr.mxu0 0.0
    %427 = vmatpush1.msra.mxu0 0.0
    %428 = vmatprep.subr.mxu0 0.0
    %429 = vmatpush1.msra.mxu0 0.0
    %430 = vmatprep.subr.mxu0 0.0
    %431 = vmatpush1.msra.mxu0 0.0
    %432 = vmatprep.subr.mxu0 0.0
    %433 = vmatpush1.msra.mxu0 0.0
    %434 = vmatprep.subr.mxu0 0.0
    %435 = vmatpush1.msra.mxu0 0.0
    %436 = vmatprep.subr.mxu0 0.0
    %437 = vmatpush1.msra.mxu0 0.0
    %438 = vmatprep.subr.mxu0 0.0
    %439 = vmatpush1.msra.mxu0 0.0
    %440 = vmatprep.subr.mxu0 0.0
    %441 = vmatpush1.msra.mxu0 0.0
    %442 = vmatprep.subr.mxu0 0.0
    %443 = vmatpush1.msra.mxu0 0.0
    %444 = vmatprep.subr.mxu0 0.0
    %445 = vmatpush1.msra.mxu0 0.0
    %446 = vmatprep.subr.mxu0 0.0
    %447 = vmatpush1.msra.mxu0 0.0
    %448 = vmatprep.subr.mxu0 0.0
    %449 = vmatpush1.msra.mxu0 0.0
    %450 = vmatprep.subr.mxu0 0.0
    %451 = vmatpush1.msra.mxu0 0.0
    %452 = vmatprep.subr.mxu0 0.0
    %453 = vmatpush1.msra.mxu0 0.0
    %454 = vmatprep.subr.mxu0 0.0
    %455 = vmatpush1.msra.mxu0 0.0
    %456 = vmatprep.subr.mxu0 0.0
    %457 = vmatpush1.msra.mxu0 0.0
    %458 = vmatprep.subr.mxu0 0.0
    %459 = vmatpush1.msra.mxu0 0.0
    %460 = vmatprep.subr.mxu0 0.0
    %461 = vmatpush1.msra.mxu0 0.0
    %462 = vmatprep.subr.mxu0 0.0
    %463 = vmatpush1.msra.mxu0 0.0
    %464 = vmatprep.mubr.f32.mxu0 0.0
    %465 = vmatmul.mubr.f32.gmra.mrb[0].mxu0 %v48
    %v466 = vpop.f32.mrb[0].mxu0
    %v467 = vadd.f32 0.0, %v466
    %v468 = vpop.f32.mrb[0].mxu0
    %469 = vdwg.mxu0
    %470 = vmatprep.subr.mxu0 0.0
    %471 = vmatpush1.msra.mxu0 %v41
    %472 = vmatprep.subr.mxu0 0.0
    %473 = vmatpush1.msra.mxu0 %v42
    %474 = vmatprep.subr.mxu0 0.0
    %475 = vmatpush1.msra.mxu0 0.0
    %476 = vmatprep.subr.mxu0 0.0
    %477 = vmatpush1.msra.mxu0 0.0
    %478 = vmatprep.subr.mxu0 0.0
    %479 = vmatpush1.msra.mxu0 0.0
    %480 = vmatprep.subr.mxu0 0.0
    %481 = vmatpush1.msra.mxu0 0.0
    %482 = vmatprep.subr.mxu0 0.0
    %483 = vmatpush1.msra.mxu0 0.0
    %484 = vmatprep.subr.mxu0 0.0
    %485 = vmatpush1.msra.mxu0 0.0
    %486 = vmatprep.subr.mxu0 0.0
    %487 = vmatpush1.msra.mxu0 0.0
    %488 = vmatprep.subr.mxu0 0.0
    %489 = vmatpush1.msra.mxu0 0.0
    %490 = vmatprep.subr.mxu0 0.0
    %491 = vmatpush1.msra.mxu0 0.0
    %492 = vmatprep.subr.mxu0 0.0
    %493 = vmatpush1.msra.mxu0 0.0
    %494 = vmatprep.subr.mxu0 0.0
    %495 = vmatpush1.msra.mxu0 0.0
    %496 = vmatprep.subr.mxu0 0.0
    %497 = vmatpush1.msra.mxu0 0.0
    %498 = vmatprep.subr.mxu0 0.0
    %499 = vmatpush1.msra.mxu0 0.0
    %500 = vmatprep.subr.mxu0 0.0
    %501 = vmatpush1.msra.mxu0 0.0
    %502 = vmatprep.subr.mxu0 0.0
    %503 = vmatpush1.msra.mxu0 0.0
    %504 = vmatprep.subr.mxu0 0.0
    %505 = vmatpush1.msra.mxu0 0.0
    %506 = vmatprep.subr.mxu0 0.0
    %507 = vmatpush1.msra.mxu0 0.0
    %508 = vmatprep.subr.mxu0 0.0
    %509 = vmatpush1.msra.mxu0 0.0
    %510 = vmatprep.subr.mxu0 0.0
    %511 = vmatpush1.msra.mxu0 0.0
    %512 = vmatprep.subr.mxu0 0.0
    %513 = vmatpush1.msra.mxu0 0.0
    %514 = vmatprep.subr.mxu0 0.0
    %515 = vmatpush1.msra.mxu0 0.0
    %516 = vmatprep.subr.mxu0 0.0
    %517 = vmatpush1.msra.mxu0 0.0
    %518 = vmatprep.subr.mxu0 0.0
    %519 = vmatpush1.msra.mxu0 0.0
    %520 = vmatprep.subr.mxu0 0.0
    %521 = vmatpush1.msra.mxu0 0.0
    %522 = vmatprep.subr.mxu0 0.0
    %523 = vmatpush1.msra.mxu0 0.0
    %524 = vmatprep.subr.mxu0 0.0
    %525 = vmatpush1.msra.mxu0 0.0
    %526 = vmatprep.subr.mxu0 0.0
    %527 = vmatpush1.msra.mxu0 0.0
    %528 = vmatprep.subr.mxu0 0.0
    %529 = vmatpush1.msra.mxu0 0.0
    %530 = vmatprep.subr.mxu0 0.0
    %531 = vmatpush1.msra.mxu0 0.0
    %532 = vmatprep.subr.mxu0 0.0
    %533 = vmatpush1.msra.mxu0 0.0
    %534 = vmatprep.mubr.f32.mxu0 0.0
    %535 = vmatmul.mubr.f32.gmra.mrb[0].mxu0 %v48
    %v536 = vpop.f32.mrb[0].mxu0
    %v537 = vadd.f32 0.0, %v536
    %v538 = vpop.f32.mrb[0].mxu0
    %539 = vdwg.mxu0
    %540 = vmatprep.subr.mxu0 0.0
    %541 = vmatpush1.msra.mxu0 %v43
    %542 = vmatprep.subr.mxu0 0.0
    %543 = vmatpush1.msra.mxu0 %v44
    %544 = vmatprep.subr.mxu0 0.0
    %545 = vmatpush1.msra.mxu0 0.0
    %546 = vmatprep.subr.mxu0 0.0
    %547 = vmatpush1.msra.mxu0 0.0
    %548 = vmatprep.subr.mxu0 0.0
    %549 = vmatpush1.msra.mxu0 0.0
    %550 = vmatprep.subr.mxu0 0.0
    %551 = vmatpush1.msra.mxu0 0.0
    %552 = vmatprep.subr.mxu0 0.0
    %553 = vmatpush1.msra.mxu0 0.0
    %554 = vmatprep.subr.mxu0 0.0
    %555 = vmatpush1.msra.mxu0 0.0
    %556 = vmatprep.subr.mxu0 0.0
    %557 = vmatpush1.msra.mxu0 0.0
    %558 = vmatprep.subr.mxu0 0.0
    %559 = vmatpush1.msra.mxu0 0.0
    %560 = vmatprep.subr.mxu0 0.0
    %561 = vmatpush1.msra.mxu0 0.0
    %562 = vmatprep.subr.mxu0 0.0
    %563 = vmatpush1.msra.mxu0 0.0
    %564 = vmatprep.subr.mxu0 0.0
    %565 = vmatpush1.msra.mxu0 0.0
    %566 = vmatprep.subr.mxu0 0.0
    %567 = vmatpush1.msra.mxu0 0.0
    %568 = vmatprep.subr.mxu0 0.0
    %569 = vmatpush1.msra.mxu0 0.0
    %570 = vmatprep.subr.mxu0 0.0
    %571 = vmatpush1.msra.mxu0 0.0
    %572 = vmatprep.subr.mxu0 0.0
    %573 = vmatpush1.msra.mxu0 0.0
    %574 = vmatprep.subr.mxu0 0.0
    %575 = vmatpush1.msra.mxu0 0.0
    %576 = vmatprep.subr.mxu0 0.0
    %577 = vmatpush1.msra.mxu0 0.0
    %578 = vmatprep.subr.mxu0 0.0
    %579 = vmatpush1.msra.mxu0 0.0
    %580 = vmatprep.subr.mxu0 0.0
    %581 = vmatpush1.msra.mxu0 0.0
    %582 = vmatprep.subr.mxu0 0.0
    %583 = vmatpush1.msra.mxu0 0.0
    %584 = vmatprep.subr.mxu0 0.0
    %585 = vmatpush1.msra.mxu0 0.0
    %586 = vmatprep.subr.mxu0 0.0
    %587 = vmatpush1.msra.mxu0 0.0
    %588 = vmatprep.subr.mxu0 0.0
    %589 = vmatpush1.msra.mxu0 0.0
    %590 = vmatprep.subr.mxu0 0.0
    %591 = vmatpush1.msra.mxu0 0.0
    %592 = vmatprep.subr.mxu0 0.0
    %593 = vmatpush1.msra.mxu0 0.0
    %594 = vmatprep.subr.mxu0 0.0
    %595 = vmatpush1.msra.mxu0 0.0
    %596 = vmatprep.subr.mxu0 0.0
    %597 = vmatpush1.msra.mxu0 0.0
    %598 = vmatprep.subr.mxu0 0.0
    %599 = vmatpush1.msra.mxu0 0.0
    %600 = vmatprep.subr.mxu0 0.0
    %601 = vmatpush1.msra.mxu0 0.0
    %602 = vmatprep.subr.mxu0 0.0
    %603 = vmatpush1.msra.mxu0 0.0
    %604 = vmatprep.mubr.f32.mxu0 0.0
    %605 = vmatmul.mubr.f32.gmra.mrb[0].mxu0 %v48
    %v606 = vpop.f32.mrb[0].mxu0
    %v607 = vadd.f32 0.0, %v606
    %v608 = vpop.f32.mrb[0].mxu0
    %609 = vdwg.mxu0
    %v610 = vld [vmem:[%s2] sm:$0xff]
    %v611 = vld [vmem:[%s2 + $0x8] sm:$0xff]
    %v613 = vsel %vm46, %v117, 0
    %v616 = vsel %vm46, %v187, 0
    %v619 = vsel %vm46, %v257, 0
    %v622 = vsel %vm46, %v327, 0
    %v625 = vsel %vm46, %v397, 0
    %v628 = vsel %vm46, %v467, 0
    %v631 = vsel %vm46, %v537, 0
    %v634 = vsel %vm46, %v607, 0
    %636 = vmatprep.subr.mxu0 0.0
    %637 = vmatpush1.msra.mxu0 %v610
    %638 = vmatprep.subr.mxu0 0.0
    %639 = vmatpush1.msra.mxu0 %v611
    %640 = vmatprep.subr.mxu0 0.0
    %641 = vmatpush1.msra.mxu0 0.0
    %642 = vmatprep.subr.mxu0 0.0
    %643 = vmatpush1.msra.mxu0 0.0
    %644 = vmatprep.subr.mxu0 0.0
    %645 = vmatpush1.msra.mxu0 0.0
    %646 = vmatprep.subr.mxu0 0.0
    %647 = vmatpush1.msra.mxu0 0.0
    %648 = vmatprep.subr.mxu0 0.0
    %649 = vmatpush1.msra.mxu0 0.0
    %650 = vmatprep.subr.mxu0 0.0
    %651 = vmatpush1.msra.mxu0 0.0
    %652 = vmatprep.subr.mxu0 0.0
    %653 = vmatpush1.msra.mxu0 0.0
    %654 = vmatprep.subr.mxu0 0.0
    %655 = vmatpush1.msra.mxu0 0.0
    %656 = vmatprep.subr.mxu0 0.0
    %657 = vmatpush1.msra.mxu0 0.0
    %658 = vmatprep.subr.mxu0 0.0
    %659 = vmatpush1.msra.mxu0 0.0
    %660 = vmatprep.subr.mxu0 0.0
    %661 = vmatpush1.msra.mxu0 0.0
    %662 = vmatprep.subr.mxu0 0.0
    %663 = vmatpush1.msra.mxu0 0.0
    %664 = vmatprep.subr.mxu0 0.0
    %665 = vmatpush1.msra.mxu0 0.0
    %666 = vmatprep.subr.mxu0 0.0
    %667 = vmatpush1.msra.mxu0 0.0
    %668 = vmatprep.subr.mxu0 0.0
    %669 = vmatpush1.msra.mxu0 0.0
    %670 = vmatprep.subr.mxu0 0.0
    %671 = vmatpush1.msra.mxu0 0.0
    %672 = vmatprep.subr.mxu0 0.0
    %673 = vmatpush1.msra.mxu0 0.0
    %674 = vmatprep.subr.mxu0 0.0
    %675 = vmatpush1.msra.mxu0 0.0
    %676 = vmatprep.subr.mxu0 0.0
    %677 = vmatpush1.msra.mxu0 0.0
    %678 = vmatprep.subr.mxu0 0.0
    %679 = vmatpush1.msra.mxu0 0.0
    %680 = vmatprep.subr.mxu0 0.0
    %681 = vmatpush1.msra.mxu0 0.0
    %682 = vmatprep.subr.mxu0 0.0
    %683 = vmatpush1.msra.mxu0 0.0
    %684 = vmatprep.subr.mxu0 0.0
    %685 = vmatpush1.msra.mxu0 0.0
    %686 = vmatprep.subr.mxu0 0.0
    %687 = vmatpush1.msra.mxu0 0.0
    %688 = vmatprep.subr.mxu0 0.0
    %689 = vmatpush1.msra.mxu0 0.0
    %690 = vmatprep.subr.mxu0 0.0
    %691 = vmatpush1.msra.mxu0 0.0
    %692 = vmatprep.subr.mxu0 0.0
    %693 = vmatpush1.msra.mxu0 0.0
    %694 = vmatprep.subr.mxu0 0.0
    %695 = vmatpush1.msra.mxu0 0.0
    %696 = vmatprep.subr.mxu0 0.0
    %697 = vmatpush1.msra.mxu0 0.0
    %698 = vmatprep.subr.mxu0 0.0
    %699 = vmatpush1.msra.mxu0 0.0
    %700 = vmatprep.mubr.f32.mxu0 0.0
    %701 = vmatmul.mubr.f32.gmra.mrb[0].mxu0 %v613
    %v702 = vpop.f32.mrb[0].mxu0
    %v703 = vadd.f32 0.0, %v702
    %v704 = vpop.f32.mrb[0].mxu0
    %705 = vmatprep.mubr.f32.mxu0 0.0
    %706 = vmatmul.mubr.f32.gmra.mrb[0].mxu0 %v616
    %v707 = vpop.f32.mrb[0].mxu0
    %v708 = vadd.f32 0.0, %v707
    %v709 = vpop.f32.mrb[0].mxu0
    %710 = vmatprep.mubr.f32.mxu0 0.0
    %711 = vmatmul.mubr.f32.gmra.mrb[0].mxu0 %v619
    %v712 = vpop.f32.mrb[0].mxu0
    %v713 = vadd.f32 0.0, %v712
    %v714 = vpop.f32.mrb[0].mxu0
    %715 = vmatprep.mubr.f32.mxu0 0.0
    %716 = vmatmul.mubr.f32.gmra.mrb[0].mxu0 %v622
    %v717 = vpop.f32.mrb[0].mxu0
    %v718 = vadd.f32 0.0, %v717
    %v719 = vpop.f32.mrb[0].mxu0
    %720 = vmatprep.mubr.f32.mxu0 0.0
    %721 = vmatmul.mubr.f32.gmra.mrb[0].mxu0 %v625
    %v722 = vpop.f32.mrb[0].mxu0
    %v723 = vadd.f32 0.0, %v722
    %v724 = vpop.f32.mrb[0].mxu0
    %725 = vmatprep.mubr.f32.mxu0 0.0
    %726 = vmatmul.mubr.f32.gmra.mrb[0].mxu0 %v628
    %v727 = vpop.f32.mrb[0].mxu0
    %v728 = vadd.f32 0.0, %v727
    %v729 = vpop.f32.mrb[0].mxu0
    %730 = vmatprep.mubr.f32.mxu0 0.0
    %731 = vmatmul.mubr.f32.gmra.mrb[0].mxu0 %v631
    %v732 = vpop.f32.mrb[0].mxu0
    %v733 = vadd.f32 0.0, %v732
    %v734 = vpop.f32.mrb[0].mxu0
    %735 = vmatprep.mubr.f32.mxu0 0.0
    %736 = vmatmul.mubr.f32.gmra.mrb[0].mxu0 %v634
    %v737 = vpop.f32.mrb[0].mxu0
    %v738 = vadd.f32 0.0, %v737
    %v739 = vpop.f32.mrb[0].mxu0
    %740 = vdwg.mxu0
    %vm741 = vcmask 64512
    %742 = vst.msk [vmem:[#allocation5] sm:$0xff] %vm741, %v703
    %743 = vst.msk [vmem:[#allocation5 + $0x8] sm:$0xff] %vm741, %v708
    %744 = vst.msk [vmem:[#allocation5 + $0x10] sm:$0xff] %vm741, %v713
    %745 = vst.msk [vmem:[#allocation5 + $0x18] sm:$0xff] %vm741, %v718
    %746 = vst.msk [vmem:[#allocation5 + $0x20] sm:$0xff] %vm741, %v723
    %747 = vst.msk [vmem:[#allocation5 + $0x28] sm:$0xff] %vm741, %v728
    %748 = vst.msk [vmem:[#allocation5 + $0x30] sm:$0xff] %vm741, %v733
    %749 = vst.msk [vmem:[#allocation5 + $0x38] sm:$0xff] %vm741, %v738
    // Predicated region
    $region18: #{tpu_custom_call.1} parent=1 // pred_check
      _
    $region19: #{tpu_custom_call.1} parent=1 // pred_check_branch
      %751 = sbr.rel (0) target = $region21
    $region20: #{tpu_custom_call.1} parent=1 // pred_region
      %s753 = ssub.s32 1024, 1024
      %754 = vsyncadd [#allocation4], %s753
      %s755 = sshll.u32 [#allocation5], 4
      %s756 = int_to_ptr.vmem [resolvable:$true] %s755
      %761 = dma.vmem_to_hbm [thread:$0]  %s756, 1024, %s3, [#allocation4], 128, 128, 8
    $region21: #{tpu_custom_call.1} parent=1 // pred_fallthru
      _
    // Predicated region
    $region22: #{tpu_custom_call.1} parent=1 // pred_check
      _
    $region23: #{tpu_custom_call.1} parent=1 // pred_check_branch
      %763 = sbr.rel (0) target = $region25
    $region24: #{tpu_custom_call.1} parent=1 // pred_region
      %764 = dma.done [#allocation4], 1024
    $region25: #{tpu_custom_call.1} parent=1 // pred_fallthru
      _
    %765 = vsyncpa [#allocation3], 1
    %766 = vsyncpa [#allocation4], 1

</llo_original>
